<compile_context>
chip_gen: v7x
topology: tpu7x:2x2x1
jax: 0.10.0
libtpu: 0.0.40
codegen_flags: <defaults>
</compile_context>

<pallas_src>
import jax
import jax.numpy as jnp
from jax.experimental import pallas as pl
from jax.experimental.pallas import tpu as pltpu

IN_FEATURES = 28 * 28          # 784
HIDDEN_1 = 100
HIDDEN_2 = 100
OUT_FEATURES = 10

HIDDEN_PAD = 128               # 100 -> 128 lane padding (exact: padded cols are ReLU(0)=0)


def _round_up(n, m):
    return (n + m - 1) // m * m


def _pick_batch_tile(B):
    if B <= 128:
        # Latency-sized single tile, rounded to the 16-row sublane pack.
        return _round_up(B, 16)
    # Throughput: at least 2 tiles (engages both v7x TensorCores on the "parallel" axis),
    # tiles capped at 1024 rows (amortizes per-step overhead; ~3 MB double-buffered x).
    return min(1024, _round_up(pl.cdiv(B, 2), 128))


def _mlp_kernel(x_ref, w1_ref, b1_ref, w2_ref, b2_ref, w3_ref, b3_ref, o_ref):
    # x tile arrives in its source dtype; cast to bf16 in-kernel (hides under the DMA).
    x = x_ref[...].astype(jnp.bfloat16)
    h1 = jnp.dot(x, w1_ref[...], preferred_element_type=jnp.float32) + b1_ref[...]
    h1 = jnp.maximum(h1, 0.0).astype(jnp.bfloat16)                       # ReLU
    h2 = jnp.dot(h1, w2_ref[...], preferred_element_type=jnp.float32) + b2_ref[...]
    h2 = jnp.maximum(h2, 0.0).astype(jnp.bfloat16)                       # ReLU
    o_ref[...] = (jnp.dot(h2, w3_ref[...], preferred_element_type=jnp.float32)
                  + b3_ref[...])


def _pad2(a, rows, cols):
    return jnp.pad(a, ((0, rows - a.shape[0]), (0, cols - a.shape[1])))


def very_simple_net_forward(img, params):
    """img: (B, 1, 28, 28) or (B, 784), any float dtype. Returns logits (B, 10) float32."""
    w1, b1, w2, b2, w3, b3 = params

    x = img.reshape(-1, IN_FEATURES)          # no dtype cast, no batch pad in the wrapper
    B = x.shape[0]
    TB = _pick_batch_tile(B)
    grid = (pl.cdiv(B, TB),)

    # Weight/bias prep is tiny (<0.3 MB total): bf16 weights padded to 128 on hidden dims,
    # f32 biases. w3/b3 keep their natural 10-wide output dim (narrow, lane-masked is fine).
    w1p = _pad2(w1, IN_FEATURES, HIDDEN_PAD).astype(jnp.bfloat16)
    w2p = _pad2(w2, HIDDEN_PAD, HIDDEN_PAD).astype(jnp.bfloat16)
    w3p = _pad2(w3, HIDDEN_PAD, OUT_FEATURES).astype(jnp.bfloat16)
    b1p = _pad2(b1.reshape(1, -1), 1, HIDDEN_PAD).astype(jnp.float32)
    b2p = _pad2(b2.reshape(1, -1), 1, HIDDEN_PAD).astype(jnp.float32)
    b3p = b3.reshape(1, OUT_FEATURES).astype(jnp.float32)

    resident = lambda shape: pl.BlockSpec(shape, lambda i: (0, 0))   # stays in VMEM

    out = pl.pallas_call(
        _mlp_kernel,
        out_shape=jax.ShapeDtypeStruct((B, OUT_FEATURES), jnp.float32),
        grid=grid,
        in_specs=[
            pl.BlockSpec((TB, IN_FEATURES), lambda i: (i, 0)),       # streamed x tiles
            resident((IN_FEATURES, HIDDEN_PAD)),
            resident((1, HIDDEN_PAD)),
            resident((HIDDEN_PAD, HIDDEN_PAD)),
            resident((1, HIDDEN_PAD)),
            resident((HIDDEN_PAD, OUT_FEATURES)),
            resident((1, OUT_FEATURES)),
        ],
        out_specs=pl.BlockSpec((TB, OUT_FEATURES), lambda i: (i, 0)),
        compiler_params=pltpu.CompilerParams(
            dimension_semantics=("parallel",)),
    )(x, w1p, b1p, w2p, b2p, w3p, b3p)

    return out


def init_params(key):
    """Deterministic init matching nn.Linear's U(-1/sqrt(fan_in), 1/sqrt(fan_in))."""
    ks = jax.random.split(key, 6)

    def linear(kw, kb, fan_in, fan_out):
        bound = 1.0 / jnp.sqrt(jnp.float32(fan_in))
        # stored as (in, out): transpose of PyTorch's (out, in) weight
        w = jax.random.uniform(kw, (fan_in, fan_out), jnp.float32, -bound, bound)
        b = jax.random.uniform(kb, (fan_out,), jnp.float32, -bound, bound)
        return w, b

    w1, b1 = linear(ks[0], ks[1], IN_FEATURES, HIDDEN_1)
    w2, b2 = linear(ks[2], ks[3], HIDDEN_1, HIDDEN_2)
    w3, b3 = linear(ks[4], ks[5], HIDDEN_2, OUT_FEATURES)
    return (w1, b1, w2, b2, w3, b3)


def reference_forward(img, params):
    w1, b1, w2, b2, w3, b3 = params
    x = img.reshape(-1, IN_FEATURES).astype(jnp.float32)
    h1 = jnp.maximum(x @ w1 + b1, 0.0)
    h2 = jnp.maximum(h1 @ w2 + b2, 0.0)
    return h2 @ w3 + b3


if __name__ == "__main__":
    key = jax.random.PRNGKey(0)
    k_params, k_img = jax.random.split(key)

    params = init_params(k_params)
    img = jax.random.normal(k_img, (4, 1, 28, 28), jnp.float32)  # NCHW, batch=4

    out = very_simple_net_forward(img, params)
    out = jax.block_until_ready(out)

    ref = reference_forward(img, params)
    assert out.shape == (4, OUT_FEATURES)
    # bf16 MXU operands with f32 accumulation -> loosened tolerance vs pure-f32 reference.
    assert jnp.allclose(out, ref, atol=5e-2, rtol=5e-2), "mismatch vs pure-JAX reference"

    print("KERNEL_OK")
</pallas_src>

<mosaic_0001>
module attributes {stable_mosaic.version = 11 : i64} {
  func.func @_mlp_kernel(%arg0: i32, %arg1: memref<16x784xf32, #tpu.memory_space<vmem>>, %arg2: memref<784x128xbf16, #tpu.memory_space<vmem>>, %arg3: memref<1x128xf32, #tpu.memory_space<vmem>>, %arg4: memref<128x128xbf16, #tpu.memory_space<vmem>>, %arg5: memref<1x128xf32, #tpu.memory_space<vmem>>, %arg6: memref<128x10xbf16, #tpu.memory_space<vmem>>, %arg7: memref<1x10xf32, #tpu.memory_space<vmem>>, %arg8: memref<16x10xf32, #tpu.memory_space<vmem>>) attributes {dimension_semantics = [#tpu.dimension_semantics<parallel>], iteration_bounds = array<i64: 1>, scalar_prefetch = 0 : i64, scratch_operands = 0 : i64, tpu.core_type = #tpu.core_type<tc>, window_params = [{transform_indices = @transform_0, window_bounds = array<i64: 16, 784>}, {pipeline_mode = #tpu.pipeline_mode<synchronous>, transform_indices = @transform_1, window_bounds = array<i64: 784, 128>}, {pipeline_mode = #tpu.pipeline_mode<synchronous>, transform_indices = @transform_2, window_bounds = array<i64: 1, 128>}, {pipeline_mode = #tpu.pipeline_mode<synchronous>, transform_indices = @transform_3, window_bounds = array<i64: 128, 128>}, {pipeline_mode = #tpu.pipeline_mode<synchronous>, transform_indices = @transform_4, window_bounds = array<i64: 1, 128>}, {pipeline_mode = #tpu.pipeline_mode<synchronous>, transform_indices = @transform_5, window_bounds = array<i64: 128, 10>}, {pipeline_mode = #tpu.pipeline_mode<synchronous>, transform_indices = @transform_6, window_bounds = array<i64: 1, 10>}, {transform_indices = @transform_7, window_bounds = array<i64: 16, 10>}]} {
    %c0 = arith.constant 0 : index
    %c0_0 = arith.constant 0 : index
    %0 = vector.load %arg1[%c0, %c0_0] : memref<16x784xf32, #tpu.memory_space<vmem>>, vector<16x784xf32>
    %1 = arith.truncf %0 : vector<16x784xf32> to vector<16x784xbf16>
    %c0_1 = arith.constant 0 : index
    %c0_2 = arith.constant 0 : index
    %2 = vector.load %arg2[%c0_1, %c0_2] : memref<784x128xbf16, #tpu.memory_space<vmem>>, vector<784x128xbf16>
    %cst = arith.constant dense<0.000000e+00> : vector<16x128xf32>
    %3 = tpu.matmul %1, %2, %cst {dimension_numbers = #tpu.dot_dimension_numbers<[1], [0], [0], [1], [0, 0, 1, 1], [], []>} : vector<16x784xbf16>, vector<784x128xbf16>, vector<16x128xf32> -> vector<16x128xf32>
    %c0_3 = arith.constant 0 : index
    %c0_4 = arith.constant 0 : index
    %4 = vector.load %arg3[%c0_3, %c0_4] : memref<1x128xf32, #tpu.memory_space<vmem>>, vector<1x128xf32>
    %5 = vector.broadcast %4 : vector<1x128xf32> to vector<16x128xf32>
    %6 = arith.addf %3, %5 : vector<16x128xf32>
    %cst_5 = arith.constant 0.000000e+00 : f32
    %7 = vector.broadcast %cst_5 : f32 to vector<16x128xf32>
    %8 = arith.maximumf %6, %7 : vector<16x128xf32>
    %9 = arith.truncf %8 : vector<16x128xf32> to vector<16x128xbf16>
    %c0_6 = arith.constant 0 : index
    %c0_7 = arith.constant 0 : index
    %10 = vector.load %arg4[%c0_6, %c0_7] : memref<128x128xbf16, #tpu.memory_space<vmem>>, vector<128x128xbf16>
    %cst_8 = arith.constant dense<0.000000e+00> : vector<16x128xf32>
    %11 = tpu.matmul %9, %10, %cst_8 {dimension_numbers = #tpu.dot_dimension_numbers<[1], [0], [0], [1], [0, 0, 1, 1], [], []>} : vector<16x128xbf16>, vector<128x128xbf16>, vector<16x128xf32> -> vector<16x128xf32>
    %c0_9 = arith.constant 0 : index
    %c0_10 = arith.constant 0 : index
    %12 = vector.load %arg5[%c0_9, %c0_10] : memref<1x128xf32, #tpu.memory_space<vmem>>, vector<1x128xf32>
    %13 = vector.broadcast %12 : vector<1x128xf32> to vector<16x128xf32>
    %14 = arith.addf %11, %13 : vector<16x128xf32>
    %cst_11 = arith.constant 0.000000e+00 : f32
    %15 = vector.broadcast %cst_11 : f32 to vector<16x128xf32>
    %16 = arith.maximumf %14, %15 : vector<16x128xf32>
    %17 = arith.truncf %16 : vector<16x128xf32> to vector<16x128xbf16>
    %c0_12 = arith.constant 0 : index
    %c0_13 = arith.constant 0 : index
    %18 = vector.load %arg6[%c0_12, %c0_13] : memref<128x10xbf16, #tpu.memory_space<vmem>>, vector<128x10xbf16>
    %cst_14 = arith.constant dense<0.000000e+00> : vector<16x10xf32>
    %19 = tpu.matmul %17, %18, %cst_14 {dimension_numbers = #tpu.dot_dimension_numbers<[1], [0], [0], [1], [0, 0, 1, 1], [], []>} : vector<16x128xbf16>, vector<128x10xbf16>, vector<16x10xf32> -> vector<16x10xf32>
    %c0_15 = arith.constant 0 : index
    %c0_16 = arith.constant 0 : index
    %20 = vector.load %arg7[%c0_15, %c0_16] : memref<1x10xf32, #tpu.memory_space<vmem>>, vector<1x10xf32>
    %21 = vector.broadcast %20 : vector<1x10xf32> to vector<16x10xf32>
    %22 = arith.addf %19, %21 : vector<16x10xf32>
    %c0_17 = arith.constant 0 : index
    %c0_18 = arith.constant 0 : index
    %23 = vector.load %arg8[%c0_17, %c0_18] : memref<16x10xf32, #tpu.memory_space<vmem>>, vector<16x10xf32>
    tpu.vector_store %arg8[%c0_17, %c0_18], %22 {strides = array<i32>} : memref<16x10xf32, #tpu.memory_space<vmem>>, vector<16x10xf32>,
    return
  }
  func.func @transform_0(%arg0: i32) -> (i32, i32) {
    %c0_i32 = arith.constant 0 : i32
    %c0_i32_0 = arith.constant 0 : i32
    return %arg0, %c0_i32 : i32, i32
  }
  func.func @transform_1(%arg0: i32) -> (i32, i32) {
    %c0_i32 = arith.constant 0 : i32
    %c0_i32_0 = arith.constant 0 : i32
    %c0_i32_1 = arith.constant 0 : i32
    return %c0_i32, %c0_i32_0 : i32, i32
  }
  func.func @transform_2(%arg0: i32) -> (i32, i32) {
    %c0_i32 = arith.constant 0 : i32
    %c0_i32_0 = arith.constant 0 : i32
    %c0_i32_1 = arith.constant 0 : i32
    return %c0_i32, %c0_i32_0 : i32, i32
  }
  func.func @transform_3(%arg0: i32) -> (i32, i32) {
    %c0_i32 = arith.constant 0 : i32
    %c0_i32_0 = arith.constant 0 : i32
    %c0_i32_1 = arith.constant 0 : i32
    return %c0_i32, %c0_i32_0 : i32, i32
  }
  func.func @transform_4(%arg0: i32) -> (i32, i32) {
    %c0_i32 = arith.constant 0 : i32
    %c0_i32_0 = arith.constant 0 : i32
    %c0_i32_1 = arith.constant 0 : i32
    return %c0_i32, %c0_i32_0 : i32, i32
  }
  func.func @transform_5(%arg0: i32) -> (i32, i32) {
    %c0_i32 = arith.constant 0 : i32
    %c0_i32_0 = arith.constant 0 : i32
    %c0_i32_1 = arith.constant 0 : i32
    return %c0_i32, %c0_i32_0 : i32, i32
  }
  func.func @transform_6(%arg0: i32) -> (i32, i32) {
    %c0_i32 = arith.constant 0 : i32
    %c0_i32_0 = arith.constant 0 : i32
    %c0_i32_1 = arith.constant 0 : i32
    return %c0_i32, %c0_i32_0 : i32, i32
  }
  func.func @transform_7(%arg0: i32) -> (i32, i32) {
    %c0_i32 = arith.constant 0 : i32
    %c0_i32_0 = arith.constant 0 : i32
    return %arg0, %c0_i32 : i32, i32
  }
}

</mosaic_0001>

<llo_original>
// kernel: tpu_custom_call.1
$region0: #{tpu_custom_call.1}
  #allocation0 [shape = 'u32[]', space=smem, size = 0x4, offset = 0x4, fixed_abs, tag = 'smem constant byte address 0x4 - core index']
  #allocation1 [shape = 'u32[144,128]{1,0:T(1,128)}', space=vmem, size = 0x12000, scoped, tag = 'internal scratch']
  %s0 = inlined_call_operand.hbm [shape: f32[4,784], index: 0, kind: input, shape index: {}]
  %s1 = inlined_call_operand.hbm [shape: bf16[784,128], index: 1, kind: input, shape index: {}]
  %s2 = inlined_call_operand.vmem [shape: f32[1,128], index: 2, kind: input, shape index: {}]
  %s3 = inlined_call_operand.vmem [shape: bf16[128,128], index: 3, kind: input, shape index: {}]
  %s4 = inlined_call_operand.vmem [shape: f32[1,128], index: 4, kind: input, shape index: {}]
  %s5 = inlined_call_operand.vmem [shape: bf16[128,10], index: 5, kind: input, shape index: {}]
  %s6 = inlined_call_operand.vmem [shape: f32[1,10], index: 6, kind: input, shape index: {}]
  %s7 = inlined_call_operand.hbm [shape: f32[4,10], index: 7, kind: output, shape index: {}]
  %s8 = sld [smem:[#allocation0]]
  $region46: #{tpu_custom_call.1} parent=0
    _
  %s10 = ssub.s32 1, %s8
  %s11 = scalar_select 0, %s10, %s8
  $region1: #{tpu_custom_call.1} parent=0
    #allocation2 [shape = 'u8[57344]{0}', space=vmem, size = 0xe000, scoped, tag = 'input window, operand 0, single buffered']
    #allocation3 [shape = 's32[1]{0}', space=sflag, size = 0x4, scoped, tag = 'scoped memory for tpu_custom_call.1']
    #allocation4 [shape = 's32[1]{0}', space=sflag, size = 0x4, scoped, tag = 'scoped memory for tpu_custom_call.1']
    #allocation5 [shape = 'u8[200704]{0}', space=vmem, size = 0x31000, scoped, tag = 'input window, operand 1, single buffered']
    #allocation6 [shape = 's32[1]{0}', space=sflag, size = 0x4, scoped, tag = 'scoped memory for tpu_custom_call.1']
    #allocation7 [shape = 'u8[8192]{0}', space=vmem, size = 0x2000, scoped, tag = 'output window, operand 0, single buffered']
    %12 = vsyncpa [#allocation3], 0
    %13 = vsyncpa [#allocation6], 0
    %14 = vsyncpa [#allocation4], 0
    // Predicated region
    $region2: #{tpu_custom_call.1} parent=1 // pred_check
      _
    $region3: #{tpu_custom_call.1} parent=1 // pred_check_branch
      %16 = sbr.rel (0) target = $region5
    $region4: #{tpu_custom_call.1} parent=1 // pred_region
      %s18 = ssub.s32 1792, 448
      %19 = vsyncadd [#allocation3], %s18
      %s20 = sshll.u32 [#allocation2], 4
      %s21 = int_to_ptr.vmem [resolvable:$true] %s20
      %26 = dma.hbm_to_vmem [thread:$0]  %s0, 448, %s21, [#allocation3], 448, 448, 28
    $region5: #{tpu_custom_call.1} parent=1 // pred_fallthru
      _
    // Predicated region
    $region6: #{tpu_custom_call.1} parent=1 // pred_check
      _
    $region7: #{tpu_custom_call.1} parent=1 // pred_check_branch
      %28 = sbr.rel (0) target = $region9
    $region8: #{tpu_custom_call.1} parent=1 // pred_region
      %s30 = ssub.s32 6272, 6272
      %31 = vsyncadd [#allocation6], %s30
      %s32 = sshll.u32 [#allocation5], 4
      %s33 = int_to_ptr.vmem [resolvable:$true] %s32
      %38 = dma.hbm_to_vmem [thread:$0]  %s1, 6272, %s33, [#allocation6], 64, 64, 4
    $region9: #{tpu_custom_call.1} parent=1 // pred_fallthru
      _
    // Predicated region
    $region10: #{tpu_custom_call.1} parent=1 // pred_check
      _
    $region11: #{tpu_custom_call.1} parent=1 // pred_check_branch
      %40 = sbr.rel (0) target = $region13
    $region12: #{tpu_custom_call.1} parent=1 // pred_region
      _
    $region13: #{tpu_custom_call.1} parent=1 // pred_fallthru
      _
    // Predicated region
    $region14: #{tpu_custom_call.1} parent=1 // pred_check
      _
    $region15: #{tpu_custom_call.1} parent=1 // pred_check_branch
      %42 = sbr.rel (0) target = $region17
    $region16: #{tpu_custom_call.1} parent=1 // pred_region
      _
    $region17: #{tpu_custom_call.1} parent=1 // pred_fallthru
      _
    // Predicated region
    $region18: #{tpu_custom_call.1} parent=1 // pred_check
      _
    $region19: #{tpu_custom_call.1} parent=1 // pred_check_branch
      %44 = sbr.rel (0) target = $region21
    $region20: #{tpu_custom_call.1} parent=1 // pred_region
      _
    $region21: #{tpu_custom_call.1} parent=1 // pred_fallthru
      _
    // Predicated region
    $region22: #{tpu_custom_call.1} parent=1 // pred_check
      _
    $region23: #{tpu_custom_call.1} parent=1 // pred_check_branch
      %46 = sbr.rel (0) target = $region25
    $region24: #{tpu_custom_call.1} parent=1 // pred_region
      _
    $region25: #{tpu_custom_call.1} parent=1 // pred_fallthru
      _
    // Predicated region
    $region26: #{tpu_custom_call.1} parent=1 // pred_check
      _
    $region27: #{tpu_custom_call.1} parent=1 // pred_check_branch
      %48 = sbr.rel (0) target = $region29
    $region28: #{tpu_custom_call.1} parent=1 // pred_region
      _
    $region29: #{tpu_custom_call.1} parent=1 // pred_fallthru
      _
    // Predicated region
    $region30: #{tpu_custom_call.1} parent=1 // pred_check
      _
    $region31: #{tpu_custom_call.1} parent=1 // pred_check_branch
      %50 = sbr.rel (0) target = $region33
    $region32: #{tpu_custom_call.1} parent=1 // pred_region
      %51 = dma.done [#allocation3], 1792
    $region33: #{tpu_custom_call.1} parent=1 // pred_fallthru
      _
    // Predicated region
    $region34: #{tpu_custom_call.1} parent=1 // pred_check
      _
    $region35: #{tpu_custom_call.1} parent=1 // pred_check_branch
      %53 = sbr.rel (0) target = $region37
    $region36: #{tpu_custom_call.1} parent=1 // pred_region
      %54 = dma.done [#allocation6], 6272
    $region37: #{tpu_custom_call.1} parent=1 // pred_fallthru
      _
    %v56 = vld [vmem:[#allocation2] sm:$0xff]
    %v57 = vld [vmem:[#allocation2 + $0x8] sm:$0xff]
    %v58 = vld [vmem:[#allocation2 + $0x10] sm:$0xff]
    %v59 = vld [vmem:[#allocation2 + $0x18] sm:$0xf]
    %v60 = vld [vmem:[#allocation2 + $0x1c] sm:$0xff]
    %v61 = vld [vmem:[#allocation2 + $0x24] sm:$0xff]
    %v62 = vld [vmem:[#allocation2 + $0x2c] sm:$0xff]
    %v63 = vld [vmem:[#allocation2 + $0x34] sm:$0xf]
    %v64 = vld [vmem:[#allocation2 + $0x38] sm:$0xff]
    %v65 = vld [vmem:[#allocation2 + $0x40] sm:$0xff]
    %v66 = vld [vmem:[#allocation2 + $0x48] sm:$0xff]
    %v67 = vld [vmem:[#allocation2 + $0x50] sm:$0xf]
    %v68 = vld [vmem:[#allocation2 + $0x54] sm:$0xff]
    %v69 = vld [vmem:[#allocation2 + $0x5c] sm:$0xff]
    %v70 = vld [vmem:[#allocation2 + $0x64] sm:$0xff]
    %v71 = vld [vmem:[#allocation2 + $0x6c] sm:$0xf]
    %v88 = vcombine.low %v56, %v60
    %v89 = vcombine.high %v56, %v60
    %v90 = vcombine.low %v57, %v61
    %v91 = vcombine.high %v57, %v61
    %v92 = vcombine.low %v58, %v62
    %v93 = vcombine.high %v58, %v62
    %v94 = vcombine.low %v59, %v63
    %v95 = vcombine.low %v64, %v68
    %v96 = vcombine.high %v64, %v68
    %v97 = vcombine.low %v65, %v69
    %v98 = vcombine.high %v65, %v69
    %v99 = vcombine.low %v66, %v70
    %v100 = vcombine.high %v66, %v70
    %v101 = vcombine.low %v67, %v71
    %v116 = vpack.c.bf16 %v95, %v88
    %v117 = vpack.c.bf16 %v96, %v89
    %v118 = vpack.c.bf16 %v97, %v90
    %v119 = vpack.c.bf16 %v98, %v91
    %v120 = vpack.c.bf16 %v99, %v92
    %v121 = vpack.c.bf16 %v100, %v93
    %v122 = vpack.c.bf16 %v101, %v94
    %v123 = vld [vmem:[#allocation5] sm:$0xf]
    %v124 = vld [vmem:[#allocation5 + $0x4] sm:$0xf]
    %v125 = vld [vmem:[#allocation5 + $0x8] sm:$0xf]
    %v126 = vld [vmem:[#allocation5 + $0xc] sm:$0xf]
    %v127 = vld [vmem:[#allocation5 + $0x10] sm:$0xf]
    %v128 = vld [vmem:[#allocation5 + $0x14] sm:$0xf]
    %v129 = vld [vmem:[#allocation5 + $0x18] sm:$0xf]
    %v130 = vld [vmem:[#allocation5 + $0x1c] sm:$0xf]
    %v131 = vld [vmem:[#allocation5 + $0x20] sm:$0xf]
    %v132 = vld [vmem:[#allocation5 + $0x24] sm:$0xf]
    %v133 = vld [vmem:[#allocation5 + $0x28] sm:$0xf]
    %v134 = vld [vmem:[#allocation5 + $0x2c] sm:$0xf]
    %v135 = vld [vmem:[#allocation5 + $0x30] sm:$0xf]
    %v136 = vld [vmem:[#allocation5 + $0x34] sm:$0xf]
    %v137 = vld [vmem:[#allocation5 + $0x38] sm:$0xf]
    %v138 = vld [vmem:[#allocation5 + $0x3c] sm:$0xf]
    %v139 = vld [vmem:[#allocation5 + $0x40] sm:$0xf]
    %v140 = vld [vmem:[#allocation5 + $0x44] sm:$0xf]
    %v141 = vld [vmem:[#allocation5 + $0x48] sm:$0xf]
    %v142 = vld [vmem:[#allocation5 + $0x4c] sm:$0xf]
    %v143 = vld [vmem:[#allocation5 + $0x50] sm:$0xf]
    %v144 = vld [vmem:[#allocation5 + $0x54] sm:$0xf]
    %v145 = vld [vmem:[#allocation5 + $0x58] sm:$0xf]
    %v146 = vld [vmem:[#allocation5 + $0x5c] sm:$0xf]
    %v147 = vld [vmem:[#allocation5 + $0x60] sm:$0xf]
    %v148 = vld [vmem:[#allocation5 + $0x64] sm:$0xf]
    %v149 = vld [vmem:[#allocation5 + $0x68] sm:$0xf]
    %v150 = vld [vmem:[#allocation5 + $0x6c] sm:$0xf]
    %v151 = vld [vmem:[#allocation5 + $0x70] sm:$0xf]
    %v152 = vld [vmem:[#allocation5 + $0x74] sm:$0xf]
    %v153 = vld [vmem:[#allocation5 + $0x78] sm:$0xf]
    %v154 = vld [vmem:[#allocation5 + $0x7c] sm:$0xf]
    %v155 = vld [vmem:[#allocation5 + $0x80] sm:$0xf]
    %v156 = vld [vmem:[#allocation5 + $0x84] sm:$0xf]
    %v157 = vld [vmem:[#allocation5 + $0x88] sm:$0xf]
    %v158 = vld [vmem:[#allocation5 + $0x8c] sm:$0xf]
    %v159 = vld [vmem:[#allocation5 + $0x90] sm:$0xf]
    %v160 = vld [vmem:[#allocation5 + $0x94] sm:$0xf]
    %v161 = vld [vmem:[#allocation5 + $0x98] sm:$0xf]
    %v162 = vld [vmem:[#allocation5 + $0x9c] sm:$0xf]
    %v163 = vld [vmem:[#allocation5 + $0xa0] sm:$0xf]
    %v164 = vld [vmem:[#allocation5 + $0xa4] sm:$0xf]
    %v165 = vld [vmem:[#allocation5 + $0xa8] sm:$0xf]
    %v166 = vld [vmem:[#allocation5 + $0xac] sm:$0xf]
    %v167 = vld [vmem:[#allocation5 + $0xb0] sm:$0xf]
    %v168 = vld [vmem:[#allocation5 + $0xb4] sm:$0xf]
    %v169 = vld [vmem:[#allocation5 + $0xb8] sm:$0xf]
    %v170 = vld [vmem:[#allocation5 + $0xbc] sm:$0xf]
    %v171 = vld [vmem:[#allocation5 + $0xc0] sm:$0xf]
    %v172 = vld [vmem:[#allocation5 + $0xc4] sm:$0xf]
    %v173 = vld [vmem:[#allocation5 + $0xc8] sm:$0xf]
    %v174 = vld [vmem:[#allocation5 + $0xcc] sm:$0xf]
    %v175 = vld [vmem:[#allocation5 + $0xd0] sm:$0xf]
    %v176 = vld [vmem:[#allocation5 + $0xd4] sm:$0xf]
    %v177 = vld [vmem:[#allocation5 + $0xd8] sm:$0xf]
    %v178 = vld [vmem:[#allocation5 + $0xdc] sm:$0xf]
    %v179 = vld [vmem:[#allocation5 + $0xe0] sm:$0xf]
    %v180 = vld [vmem:[#allocation5 + $0xe4] sm:$0xf]
    %v181 = vld [vmem:[#allocation5 + $0xe8] sm:$0xf]
    %v182 = vld [vmem:[#allocation5 + $0xec] sm:$0xf]
    %v183 = vld [vmem:[#allocation5 + $0xf0] sm:$0xf]
    %v184 = vld [vmem:[#allocation5 + $0xf4] sm:$0xf]
    %v185 = vld [vmem:[#allocation5 + $0xf8] sm:$0xf]
    %v186 = vld [vmem:[#allocation5 + $0xfc] sm:$0xf]
    %v187 = vld [vmem:[#allocation5 + $0x100] sm:$0xf]
    %v188 = vld [vmem:[#allocation5 + $0x104] sm:$0xf]
    %v189 = vld [vmem:[#allocation5 + $0x108] sm:$0xf]
    %v190 = vld [vmem:[#allocation5 + $0x10c] sm:$0xf]
    %v191 = vld [vmem:[#allocation5 + $0x110] sm:$0xf]
    %v192 = vld [vmem:[#allocation5 + $0x114] sm:$0xf]
    %v193 = vld [vmem:[#allocation5 + $0x118] sm:$0xf]
    %v194 = vld [vmem:[#allocation5 + $0x11c] sm:$0xf]
    %v195 = vld [vmem:[#allocation5 + $0x120] sm:$0xf]
    %v196 = vld [vmem:[#allocation5 + $0x124] sm:$0xf]
    %v197 = vld [vmem:[#allocation5 + $0x128] sm:$0xf]
    %v198 = vld [vmem:[#allocation5 + $0x12c] sm:$0xf]
    %v199 = vld [vmem:[#allocation5 + $0x130] sm:$0xf]
    %v200 = vld [vmem:[#allocation5 + $0x134] sm:$0xf]
    %v201 = vld [vmem:[#allocation5 + $0x138] sm:$0xf]
    %v202 = vld [vmem:[#allocation5 + $0x13c] sm:$0xf]
    %v203 = vld [vmem:[#allocation5 + $0x140] sm:$0xf]
    %v204 = vld [vmem:[#allocation5 + $0x144] sm:$0xf]
    %v205 = vld [vmem:[#allocation5 + $0x148] sm:$0xf]
    %v206 = vld [vmem:[#allocation5 + $0x14c] sm:$0xf]
    %v207 = vld [vmem:[#allocation5 + $0x150] sm:$0xf]
    %v208 = vld [vmem:[#allocation5 + $0x154] sm:$0xf]
    %v209 = vld [vmem:[#allocation5 + $0x158] sm:$0xf]
    %v210 = vld [vmem:[#allocation5 + $0x15c] sm:$0xf]
    %v211 = vld [vmem:[#allocation5 + $0x160] sm:$0xf]
    %v212 = vld [vmem:[#allocation5 + $0x164] sm:$0xf]
    %v213 = vld [vmem:[#allocation5 + $0x168] sm:$0xf]
    %v214 = vld [vmem:[#allocation5 + $0x16c] sm:$0xf]
    %v215 = vld [vmem:[#allocation5 + $0x170] sm:$0xf]
    %v216 = vld [vmem:[#allocation5 + $0x174] sm:$0xf]
    %v217 = vld [vmem:[#allocation5 + $0x178] sm:$0xf]
    %v218 = vld [vmem:[#allocation5 + $0x17c] sm:$0xf]
    %v219 = vld [vmem:[#allocation5 + $0x180] sm:$0xf]
    %v220 = vld [vmem:[#allocation5 + $0x184] sm:$0xf]
    %v221 = vld [vmem:[%s2] sm:$0x1]
    %v223 = vlaneseq
    %v224 = vshrl.u32 %v223, 7
    %v225 = vsub.s32 0, %v224
    %v226 = vrot.slane %v221, %v225
    %v326 = vunpack.c.l.b16 %v123
    %v327 = vunpack.c.l.b16 %v124
    %v328 = vunpack.c.l.b16 %v125
    %v329 = vunpack.c.l.b16 %v126
    %v330 = vunpack.c.l.b16 %v127
    %v331 = vunpack.c.l.b16 %v128
    %v332 = vunpack.c.l.b16 %v129
    %v333 = vunpack.c.l.b16 %v130
    %v334 = vunpack.c.l.b16 %v131
    %v335 = vunpack.c.l.b16 %v132
    %v336 = vunpack.c.l.b16 %v133
    %v337 = vunpack.c.l.b16 %v134
    %v338 = vunpack.c.l.b16 %v135
    %v339 = vunpack.c.l.b16 %v136
    %v340 = vunpack.c.l.b16 %v137
    %v341 = vunpack.c.l.b16 %v138
    %v342 = vunpack.c.l.b16 %v139
    %v343 = vunpack.c.l.b16 %v140
    %v344 = vunpack.c.l.b16 %v141
    %v345 = vunpack.c.l.b16 %v142
    %v346 = vunpack.c.l.b16 %v143
    %v347 = vunpack.c.l.b16 %v144
    %v348 = vunpack.c.l.b16 %v145
    %v349 = vunpack.c.l.b16 %v146
    %v350 = vunpack.c.l.b16 %v147
    %v351 = vunpack.c.l.b16 %v148
    %v352 = vunpack.c.l.b16 %v149
    %v353 = vunpack.c.l.b16 %v150
    %v354 = vunpack.c.l.b16 %v151
    %v355 = vunpack.c.l.b16 %v152
    %v356 = vunpack.c.l.b16 %v153
    %v357 = vunpack.c.l.b16 %v154
    %v358 = vunpack.c.l.b16 %v155
    %v359 = vunpack.c.l.b16 %v156
    %v360 = vunpack.c.l.b16 %v157
    %v361 = vunpack.c.l.b16 %v158
    %v362 = vunpack.c.l.b16 %v159
    %v363 = vunpack.c.l.b16 %v160
    %v364 = vunpack.c.l.b16 %v161
    %v365 = vunpack.c.l.b16 %v162
    %v366 = vunpack.c.l.b16 %v163
    %v367 = vunpack.c.l.b16 %v164
    %v368 = vunpack.c.l.b16 %v165
    %v369 = vunpack.c.l.b16 %v166
    %v370 = vunpack.c.l.b16 %v167
    %v371 = vunpack.c.l.b16 %v168
    %v372 = vunpack.c.l.b16 %v169
    %v373 = vunpack.c.l.b16 %v170
    %v374 = vunpack.c.l.b16 %v171
    %v375 = vunpack.c.l.b16 %v172
    %v376 = vunpack.c.l.b16 %v173
    %v377 = vunpack.c.l.b16 %v174
    %v378 = vunpack.c.l.b16 %v175
    %v379 = vunpack.c.l.b16 %v176
    %v380 = vunpack.c.l.b16 %v177
    %v381 = vunpack.c.l.b16 %v178
    %v382 = vunpack.c.l.b16 %v179
    %v383 = vunpack.c.l.b16 %v180
    %v384 = vunpack.c.l.b16 %v181
    %v385 = vunpack.c.l.b16 %v182
    %v386 = vunpack.c.l.b16 %v183
    %v387 = vunpack.c.l.b16 %v184
    %v388 = vunpack.c.l.b16 %v185
    %v389 = vunpack.c.l.b16 %v186
    %v390 = vunpack.c.l.b16 %v187
    %v391 = vunpack.c.l.b16 %v188
    %v392 = vunpack.c.l.b16 %v189
    %v393 = vunpack.c.l.b16 %v190
    %v394 = vunpack.c.l.b16 %v191
    %v395 = vunpack.c.l.b16 %v192
    %v396 = vunpack.c.l.b16 %v193
    %v397 = vunpack.c.l.b16 %v194
    %v398 = vunpack.c.l.b16 %v195
    %v399 = vunpack.c.l.b16 %v196
    %v400 = vunpack.c.l.b16 %v197
    %v401 = vunpack.c.l.b16 %v198
    %v402 = vunpack.c.l.b16 %v199
    %v403 = vunpack.c.l.b16 %v200
    %v404 = vunpack.c.l.b16 %v201
    %v405 = vunpack.c.l.b16 %v202
    %v406 = vunpack.c.l.b16 %v203
    %v407 = vunpack.c.l.b16 %v204
    %v408 = vunpack.c.l.b16 %v205
    %v409 = vunpack.c.l.b16 %v206
    %v410 = vunpack.c.l.b16 %v207
    %v411 = vunpack.c.l.b16 %v208
    %v412 = vunpack.c.l.b16 %v209
    %v413 = vunpack.c.l.b16 %v210
    %v414 = vunpack.c.l.b16 %v211
    %v415 = vunpack.c.l.b16 %v212
    %v416 = vunpack.c.l.b16 %v213
    %v417 = vunpack.c.l.b16 %v214
    %v418 = vunpack.c.l.b16 %v215
    %v419 = vunpack.c.l.b16 %v216
    %v420 = vunpack.c.l.b16 %v217
    %v421 = vunpack.c.l.b16 %v218
    %v422 = vunpack.c.l.b16 %v219
    %v423 = vunpack.c.l.b16 %v220
    %v424 = vpack.c.b16 %v327, %v326
    %v425 = vpack.c.b16 %v329, %v328
    %v426 = vpack.c.b16 %v331, %v330
    %v427 = vpack.c.b16 %v333, %v332
    %v428 = vpack.c.b16 %v335, %v334
    %v429 = vpack.c.b16 %v337, %v336
    %v430 = vpack.c.b16 %v339, %v338
    %v431 = vpack.c.b16 %v341, %v340
    %v432 = vpack.c.b16 %v343, %v342
    %v433 = vpack.c.b16 %v345, %v344
    %v434 = vpack.c.b16 %v347, %v346
    %v435 = vpack.c.b16 %v349, %v348
    %v436 = vpack.c.b16 %v351, %v350
    %v437 = vpack.c.b16 %v353, %v352
    %v438 = vpack.c.b16 %v355, %v354
    %v439 = vpack.c.b16 %v357, %v356
    %v440 = vpack.c.b16 %v359, %v358
    %v441 = vpack.c.b16 %v361, %v360
    %v442 = vpack.c.b16 %v363, %v362
    %v443 = vpack.c.b16 %v365, %v364
    %v444 = vpack.c.b16 %v367, %v366
    %v445 = vpack.c.b16 %v369, %v368
    %v446 = vpack.c.b16 %v371, %v370
    %v447 = vpack.c.b16 %v373, %v372
    %v448 = vpack.c.b16 %v375, %v374
    %v449 = vpack.c.b16 %v377, %v376
    %v450 = vpack.c.b16 %v379, %v378
    %v451 = vpack.c.b16 %v381, %v380
    %v452 = vpack.c.b16 %v383, %v382
    %v453 = vpack.c.b16 %v385, %v384
    %v454 = vpack.c.b16 %v387, %v386
    %v455 = vpack.c.b16 %v389, %v388
    %v456 = vpack.c.b16 %v391, %v390
    %v457 = vpack.c.b16 %v393, %v392
    %v458 = vpack.c.b16 %v395, %v394
    %v459 = vpack.c.b16 %v397, %v396
    %v460 = vpack.c.b16 %v399, %v398
    %v461 = vpack.c.b16 %v401, %v400
    %v462 = vpack.c.b16 %v403, %v402
    %v463 = vpack.c.b16 %v405, %v404
    %v464 = vpack.c.b16 %v407, %v406
    %v465 = vpack.c.b16 %v409, %v408
    %v466 = vpack.c.b16 %v411, %v410
    %v467 = vpack.c.b16 %v413, %v412
    %v468 = vpack.c.b16 %v415, %v414
    %v469 = vpack.c.b16 %v417, %v416
    %v470 = vpack.c.b16 %v419, %v418
    %v471 = vpack.c.b16 %v421, %v420
    %v472 = vpack.c.b16 %v423, %v422
    %vm522 = vcmask 130048
    %v524 = vsel %vm522, %v122, 0
    %526 = vmatprep.subr.bf16.mxu0 0
    %527 = vmatpush1.bf16.msra.mxu0 %v424
    %528 = vmatprep.subr.bf16.mxu0 0
    %529 = vmatpush1.bf16.msra.mxu0 %v425
    %530 = vmatprep.subr.bf16.mxu0 0
    %531 = vmatpush1.bf16.msra.mxu0 %v426
    %532 = vmatprep.subr.bf16.mxu0 0
    %533 = vmatpush1.bf16.msra.mxu0 %v427
    %534 = vmatprep.subr.bf16.mxu0 0
    %535 = vmatpush1.bf16.msra.mxu0 %v428
    %536 = vmatprep.subr.bf16.mxu0 0
    %537 = vmatpush1.bf16.msra.mxu0 %v429
    %538 = vmatprep.subr.bf16.mxu0 0
    %539 = vmatpush1.bf16.msra.mxu0 %v430
    %540 = vmatprep.subr.bf16.mxu0 0
    %541 = vmatpush1.bf16.msra.mxu0 %v431
    %542 = vmatprep.subr.bf16.mxu0 0
    %543 = vmatpush1.bf16.msra.mxu0 %v432
    %544 = vmatprep.subr.bf16.mxu0 0
    %545 = vmatpush1.bf16.msra.mxu0 %v433
    %546 = vmatprep.subr.bf16.mxu0 0
    %547 = vmatpush1.bf16.msra.mxu0 %v434
    %548 = vmatprep.subr.bf16.mxu0 0
    %549 = vmatpush1.bf16.msra.mxu0 %v435
    %550 = vmatprep.subr.bf16.mxu0 0
    %551 = vmatpush1.bf16.msra.mxu0 %v436
    %552 = vmatprep.subr.bf16.mxu0 0
    %553 = vmatpush1.bf16.msra.mxu0 %v437
    %554 = vmatprep.subr.bf16.mxu0 0
    %555 = vmatpush1.bf16.msra.mxu0 %v438
    %556 = vmatprep.subr.bf16.mxu0 0
    %557 = vmatpush1.bf16.msra.mxu0 %v439
    %558 = vmatprep.mubr.bf16.mxu0 %v117
    %559 = vmatmul.mubr.bf16.gmra.mrb[0].mxu0 %v116
    %v560 = vpop.f32.mrb[0].mxu0
    %v561 = vadd.f32 %v226, %v560
    %v562 = vpop.f32.mrb[0].mxu0
    %v563 = vpop.f32.mrb[0].mxu0
    %v564 = vadd.f32 %v226, %v563
    %v565 = vpop.f32.mrb[0].mxu0
    %566 = vdwg.mxu0
    %567 = vmatprep.subr.bf16.mxu0 0
    %568 = vmatpush1.bf16.msra.mxu0 %v440
    %569 = vmatprep.subr.bf16.mxu0 0
    %570 = vmatpush1.bf16.msra.mxu0 %v441
    %571 = vmatprep.subr.bf16.mxu0 0
    %572 = vmatpush1.bf16.msra.mxu0 %v442
    %573 = vmatprep.subr.bf16.mxu0 0
    %574 = vmatpush1.bf16.msra.mxu0 %v443
    %575 = vmatprep.subr.bf16.mxu0 0
    %576 = vmatpush1.bf16.msra.mxu0 %v444
    %577 = vmatprep.subr.bf16.mxu0 0
    %578 = vmatpush1.bf16.msra.mxu0 %v445
    %579 = vmatprep.subr.bf16.mxu0 0
    %580 = vmatpush1.bf16.msra.mxu0 %v446
    %581 = vmatprep.subr.bf16.mxu0 0
    %582 = vmatpush1.bf16.msra.mxu0 %v447
    %583 = vmatprep.subr.bf16.mxu0 0
    %584 = vmatpush1.bf16.msra.mxu0 %v448
    %585 = vmatprep.subr.bf16.mxu0 0
    %586 = vmatpush1.bf16.msra.mxu0 %v449
    %587 = vmatprep.subr.bf16.mxu0 0
    %588 = vmatpush1.bf16.msra.mxu0 %v450
    %589 = vmatprep.subr.bf16.mxu0 0
    %590 = vmatpush1.bf16.msra.mxu0 %v451
    %591 = vmatprep.subr.bf16.mxu0 0
    %592 = vmatpush1.bf16.msra.mxu0 %v452
    %593 = vmatprep.subr.bf16.mxu0 0
    %594 = vmatpush1.bf16.msra.mxu0 %v453
    %595 = vmatprep.subr.bf16.mxu0 0
    %596 = vmatpush1.bf16.msra.mxu0 %v454
    %597 = vmatprep.subr.bf16.mxu0 0
    %598 = vmatpush1.bf16.msra.mxu0 %v455
    %599 = vmatprep.mubr.bf16.mxu0 %v119
    %600 = vmatmul.mubr.bf16.gmra.mrb[0].mxu0 %v118
    %v601 = vpop.f32.mrb[0].mxu0
    %v602 = vadd.f32 %v561, %v601
    %v603 = vpop.f32.mrb[0].mxu0
    %v604 = vpop.f32.mrb[0].mxu0
    %v605 = vadd.f32 %v564, %v604
    %v606 = vpop.f32.mrb[0].mxu0
    %607 = vdwg.mxu0
    %608 = vmatprep.subr.bf16.mxu0 0
    %609 = vmatpush1.bf16.msra.mxu0 %v456
    %610 = vmatprep.subr.bf16.mxu0 0
    %611 = vmatpush1.bf16.msra.mxu0 %v457
    %612 = vmatprep.subr.bf16.mxu0 0
    %613 = vmatpush1.bf16.msra.mxu0 %v458
    %614 = vmatprep.subr.bf16.mxu0 0
    %615 = vmatpush1.bf16.msra.mxu0 %v459
    %616 = vmatprep.subr.bf16.mxu0 0
    %617 = vmatpush1.bf16.msra.mxu0 %v460
    %618 = vmatprep.subr.bf16.mxu0 0
    %619 = vmatpush1.bf16.msra.mxu0 %v461
    %620 = vmatprep.subr.bf16.mxu0 0
    %621 = vmatpush1.bf16.msra.mxu0 %v462
    %622 = vmatprep.subr.bf16.mxu0 0
    %623 = vmatpush1.bf16.msra.mxu0 %v463
    %624 = vmatprep.subr.bf16.mxu0 0
    %625 = vmatpush1.bf16.msra.mxu0 %v464
    %626 = vmatprep.subr.bf16.mxu0 0
    %627 = vmatpush1.bf16.msra.mxu0 %v465
    %628 = vmatprep.subr.bf16.mxu0 0
    %629 = vmatpush1.bf16.msra.mxu0 %v466
    %630 = vmatprep.subr.bf16.mxu0 0
    %631 = vmatpush1.bf16.msra.mxu0 %v467
    %632 = vmatprep.subr.bf16.mxu0 0
    %633 = vmatpush1.bf16.msra.mxu0 %v468
    %634 = vmatprep.subr.bf16.mxu0 0
    %635 = vmatpush1.bf16.msra.mxu0 %v469
    %636 = vmatprep.subr.bf16.mxu0 0
    %637 = vmatpush1.bf16.msra.mxu0 %v470
    %638 = vmatprep.subr.bf16.mxu0 0
    %639 = vmatpush1.bf16.msra.mxu0 %v471
    %640 = vmatprep.mubr.bf16.mxu0 %v121
    %641 = vmatmul.mubr.bf16.gmra.mrb[0].mxu0 %v120
    %v642 = vpop.f32.mrb[0].mxu0
    %v643 = vadd.f32 %v602, %v642
    %v644 = vpop.f32.mrb[0].mxu0
    %v645 = vpop.f32.mrb[0].mxu0
    %v646 = vadd.f32 %v605, %v645
    %v647 = vpop.f32.mrb[0].mxu0
    %648 = vdwg.mxu0
    %649 = vmatprep.subr.bf16.mxu0 0
    %650 = vmatpush1.bf16.msra.mxu0 %v472
    %651 = vmatprep.subr.bf16.mxu0 0
    %652 = vmatpush1.bf16.msra.mxu0 0
    %653 = vmatprep.subr.bf16.mxu0 0
    %654 = vmatpush1.bf16.msra.mxu0 0
    %655 = vmatprep.subr.bf16.mxu0 0
    %656 = vmatpush1.bf16.msra.mxu0 0
    %657 = vmatprep.subr.bf16.mxu0 0
    %658 = vmatpush1.bf16.msra.mxu0 0
    %659 = vmatprep.subr.bf16.mxu0 0
    %660 = vmatpush1.bf16.msra.mxu0 0
    %661 = vmatprep.subr.bf16.mxu0 0
    %662 = vmatpush1.bf16.msra.mxu0 0
    %663 = vmatprep.subr.bf16.mxu0 0
    %664 = vmatpush1.bf16.msra.mxu0 0
    %665 = vmatprep.subr.bf16.mxu0 0
    %666 = vmatpush1.bf16.msra.mxu0 0
    %667 = vmatprep.subr.bf16.mxu0 0
    %668 = vmatpush1.bf16.msra.mxu0 0
    %669 = vmatprep.subr.bf16.mxu0 0
    %670 = vmatpush1.bf16.msra.mxu0 0
    %671 = vmatprep.subr.bf16.mxu0 0
    %672 = vmatpush1.bf16.msra.mxu0 0
    %673 = vmatprep.subr.bf16.mxu0 0
    %674 = vmatpush1.bf16.msra.mxu0 0
    %675 = vmatprep.subr.bf16.mxu0 0
    %676 = vmatpush1.bf16.msra.mxu0 0
    %677 = vmatprep.subr.bf16.mxu0 0
    %678 = vmatpush1.bf16.msra.mxu0 0
    %679 = vmatprep.subr.bf16.mxu0 0
    %680 = vmatpush1.bf16.msra.mxu0 0
    %681 = vmatprep.mubr.bf16.mxu0 0
    %682 = vmatmul.mubr.bf16.gmra.mrb[0].mxu0 %v524
    %v683 = vpop.f32.mrb[0].mxu0
    %v684 = vadd.f32 %v643, %v683
    %v685 = vpop.f32.mrb[0].mxu0
    %v686 = vpop.f32.mrb[0].mxu0
    %v687 = vadd.f32 %v646, %v686
    %v688 = vpop.f32.mrb[0].mxu0
    %689 = vdwg.mxu0
    %v690 = vmax.f32 %v684, 0.0
    %v691 = vmax.f32 %v687, 0.0
    %v692 = vpack.c.bf16 %v691, %v690
    %v693 = vld [vmem:[%s3] sm:$0xf]
    %v694 = vld [vmem:[%s3 + $0x4] sm:$0xf]
    %v695 = vld [vmem:[%s3 + $0x8] sm:$0xf]
    %v696 = vld [vmem:[%s3 + $0xc] sm:$0xf]
    %v697 = vld [vmem:[%s3 + $0x10] sm:$0xf]
    %v698 = vld [vmem:[%s3 + $0x14] sm:$0xf]
    %v699 = vld [vmem:[%s3 + $0x18] sm:$0xf]
    %v700 = vld [vmem:[%s3 + $0x1c] sm:$0xf]
    %v701 = vld [vmem:[%s3 + $0x20] sm:$0xf]
    %v702 = vld [vmem:[%s3 + $0x24] sm:$0xf]
    %v703 = vld [vmem:[%s3 + $0x28] sm:$0xf]
    %v704 = vld [vmem:[%s3 + $0x2c] sm:$0xf]
    %v705 = vld [vmem:[%s3 + $0x30] sm:$0xf]
    %v706 = vld [vmem:[%s3 + $0x34] sm:$0xf]
    %v707 = vld [vmem:[%s3 + $0x38] sm:$0xf]
    %v708 = vld [vmem:[%s3 + $0x3c] sm:$0xf]
    %v709 = vld [vmem:[%s4] sm:$0x1]
    %v711 = vlaneseq
    %v712 = vshrl.u32 %v711, 7
    %v713 = vsub.s32 0, %v712
    %v714 = vrot.slane %v709, %v713
    %v732 = vunpack.c.l.b16 %v693
    %v733 = vunpack.c.l.b16 %v694
    %v734 = vunpack.c.l.b16 %v695
    %v735 = vunpack.c.l.b16 %v696
    %v736 = vunpack.c.l.b16 %v697
    %v737 = vunpack.c.l.b16 %v698
    %v738 = vunpack.c.l.b16 %v699
    %v739 = vunpack.c.l.b16 %v700
    %v740 = vunpack.c.l.b16 %v701
    %v741 = vunpack.c.l.b16 %v702
    %v742 = vunpack.c.l.b16 %v703
    %v743 = vunpack.c.l.b16 %v704
    %v744 = vunpack.c.l.b16 %v705
    %v745 = vunpack.c.l.b16 %v706
    %v746 = vunpack.c.l.b16 %v707
    %v747 = vunpack.c.l.b16 %v708
    %v748 = vpack.c.b16 %v733, %v732
    %v749 = vpack.c.b16 %v735, %v734
    %v750 = vpack.c.b16 %v737, %v736
    %v751 = vpack.c.b16 %v739, %v738
    %v752 = vpack.c.b16 %v741, %v740
    %v753 = vpack.c.b16 %v743, %v742
    %v754 = vpack.c.b16 %v745, %v744
    %v755 = vpack.c.b16 %v747, %v746
    %764 = vmatprep.subr.bf16.mxu0 0
    %765 = vmatpush1.bf16.msra.mxu0 %v748
    %766 = vmatprep.subr.bf16.mxu0 0
    %767 = vmatpush1.bf16.msra.mxu0 %v749
    %768 = vmatprep.subr.bf16.mxu0 0
    %769 = vmatpush1.bf16.msra.mxu0 %v750
    %770 = vmatprep.subr.bf16.mxu0 0
    %771 = vmatpush1.bf16.msra.mxu0 %v751
    %772 = vmatprep.subr.bf16.mxu0 0
    %773 = vmatpush1.bf16.msra.mxu0 %v752
    %774 = vmatprep.subr.bf16.mxu0 0
    %775 = vmatpush1.bf16.msra.mxu0 %v753
    %776 = vmatprep.subr.bf16.mxu0 0
    %777 = vmatpush1.bf16.msra.mxu0 %v754
    %778 = vmatprep.subr.bf16.mxu0 0
    %779 = vmatpush1.bf16.msra.mxu0 %v755
    %780 = vmatprep.subr.bf16.mxu0 0
    %781 = vmatpush1.bf16.msra.mxu0 0
    %782 = vmatprep.subr.bf16.mxu0 0
    %783 = vmatpush1.bf16.msra.mxu0 0
    %784 = vmatprep.subr.bf16.mxu0 0
    %785 = vmatpush1.bf16.msra.mxu0 0
    %786 = vmatprep.subr.bf16.mxu0 0
    %787 = vmatpush1.bf16.msra.mxu0 0
    %788 = vmatprep.subr.bf16.mxu0 0
    %789 = vmatpush1.bf16.msra.mxu0 0
    %790 = vmatprep.subr.bf16.mxu0 0
    %791 = vmatpush1.bf16.msra.mxu0 0
    %792 = vmatprep.subr.bf16.mxu0 0
    %793 = vmatpush1.bf16.msra.mxu0 0
    %794 = vmatprep.subr.bf16.mxu0 0
    %795 = vmatpush1.bf16.msra.mxu0 0
    %796 = vmatprep.mubr.bf16.mxu0 0
    %797 = vmatmul.mubr.bf16.gmra.mrb[0].mxu0 %v692
    %v798 = vpop.f32.mrb[0].mxu0
    %v799 = vadd.f32 %v714, %v798
    %v800 = vpop.f32.mrb[0].mxu0
    %v801 = vpop.f32.mrb[0].mxu0
    %v802 = vadd.f32 %v714, %v801
    %v803 = vpop.f32.mrb[0].mxu0
    %804 = vdwg.mxu0
    %v805 = vmax.f32 %v799, 0.0
    %v806 = vmax.f32 %v802, 0.0
    %v807 = vpack.c.bf16 %v806, %v805
    %v808 = vld [vmem:[%s5] sm:$0xf]
    %v809 = vld [vmem:[%s5 + $0x4] sm:$0xf]
    %v810 = vld [vmem:[%s5 + $0x8] sm:$0xf]
    %v811 = vld [vmem:[%s5 + $0xc] sm:$0xf]
    %v812 = vld [vmem:[%s5 + $0x10] sm:$0xf]
    %v813 = vld [vmem:[%s5 + $0x14] sm:$0xf]
    %v814 = vld [vmem:[%s5 + $0x18] sm:$0xf]
    %v815 = vld [vmem:[%s5 + $0x1c] sm:$0xf]
    %v816 = vld [vmem:[%s5 + $0x20] sm:$0xf]
    %v817 = vld [vmem:[%s5 + $0x24] sm:$0xf]
    %v818 = vld [vmem:[%s5 + $0x28] sm:$0xf]
    %v819 = vld [vmem:[%s5 + $0x2c] sm:$0xf]
    %v820 = vld [vmem:[%s5 + $0x30] sm:$0xf]
    %v821 = vld [vmem:[%s5 + $0x34] sm:$0xf]
    %v822 = vld [vmem:[%s5 + $0x38] sm:$0xf]
    %v823 = vld [vmem:[%s5 + $0x3c] sm:$0xf]
    %v824 = vld [vmem:[%s6] sm:$0x1]
    %v826 = vlaneseq
    %v827 = vshrl.u32 %v826, 7
    %v828 = vsub.s32 0, %v827
    %v829 = vrot.slane %v824, %v828
    %v847 = vunpack.c.l.b16 %v808
    %v848 = vunpack.c.l.b16 %v809
    %v849 = vunpack.c.l.b16 %v810
    %v850 = vunpack.c.l.b16 %v811
    %v851 = vunpack.c.l.b16 %v812
    %v852 = vunpack.c.l.b16 %v813
    %v853 = vunpack.c.l.b16 %v814
    %v854 = vunpack.c.l.b16 %v815
    %v855 = vunpack.c.l.b16 %v816
    %v856 = vunpack.c.l.b16 %v817
    %v857 = vunpack.c.l.b16 %v818
    %v858 = vunpack.c.l.b16 %v819
    %v859 = vunpack.c.l.b16 %v820
    %v860 = vunpack.c.l.b16 %v821
    %v861 = vunpack.c.l.b16 %v822
    %v862 = vunpack.c.l.b16 %v823
    %v863 = vpack.c.b16 %v848, %v847
    %v864 = vpack.c.b16 %v850, %v849
    %v865 = vpack.c.b16 %v852, %v851
    %v866 = vpack.c.b16 %v854, %v853
    %v867 = vpack.c.b16 %v856, %v855
    %v868 = vpack.c.b16 %v858, %v857
    %v869 = vpack.c.b16 %v860, %v859
    %v870 = vpack.c.b16 %v862, %v861
    %879 = vmatprep.subr.bf16.mxu0 0
    %880 = vmatpush1.bf16.msra.mxu0 %v863
    %881 = vmatprep.subr.bf16.mxu0 0
    %882 = vmatpush1.bf16.msra.mxu0 %v864
    %883 = vmatprep.subr.bf16.mxu0 0
    %884 = vmatpush1.bf16.msra.mxu0 %v865
    %885 = vmatprep.subr.bf16.mxu0 0
    %886 = vmatpush1.bf16.msra.mxu0 %v866
    %887 = vmatprep.subr.bf16.mxu0 0
    %888 = vmatpush1.bf16.msra.mxu0 %v867
    %889 = vmatprep.subr.bf16.mxu0 0
    %890 = vmatpush1.bf16.msra.mxu0 %v868
    %891 = vmatprep.subr.bf16.mxu0 0
    %892 = vmatpush1.bf16.msra.mxu0 %v869
    %893 = vmatprep.subr.bf16.mxu0 0
    %894 = vmatpush1.bf16.msra.mxu0 %v870
    %895 = vmatprep.subr.bf16.mxu0 0
    %896 = vmatpush1.bf16.msra.mxu0 0
    %897 = vmatprep.subr.bf16.mxu0 0
    %898 = vmatpush1.bf16.msra.mxu0 0
    %899 = vmatprep.subr.bf16.mxu0 0
    %900 = vmatpush1.bf16.msra.mxu0 0
    %901 = vmatprep.subr.bf16.mxu0 0
    %902 = vmatpush1.bf16.msra.mxu0 0
    %903 = vmatprep.subr.bf16.mxu0 0
    %904 = vmatpush1.bf16.msra.mxu0 0
    %905 = vmatprep.subr.bf16.mxu0 0
    %906 = vmatpush1.bf16.msra.mxu0 0
    %907 = vmatprep.subr.bf16.mxu0 0
    %908 = vmatpush1.bf16.msra.mxu0 0
    %909 = vmatprep.subr.bf16.mxu0 0
    %910 = vmatpush1.bf16.msra.mxu0 0
    %911 = vmatprep.mubr.bf16.mxu0 0
    %912 = vmatmul.mubr.bf16.gmra.mrb[0].mxu0 %v807
    %v913 = vpop.f32.mrb[0].mxu0
    %v914 = vadd.f32 %v829, %v913
    %v915 = vpop.f32.mrb[0].mxu0
    %v916 = vpop.f32.mrb[0].mxu0
    %v917 = vadd.f32 %v829, %v916
    %v918 = vpop.f32.mrb[0].mxu0
    %919 = vdwg.mxu0
    %vm920 = vcmask 80896
    %921 = vst.msk [vmem:[#allocation7] sm:$0xff] %vm920, %v914
    %922 = vst.msk [vmem:[#allocation7 + $0x8] sm:$0xff] %vm920, %v917
    // Predicated region
    $region38: #{tpu_custom_call.1} parent=1 // pred_check
      _
    $region39: #{tpu_custom_call.1} parent=1 // pred_check_branch
      %924 = sbr.rel (0) target = $region41
    $region40: #{tpu_custom_call.1} parent=1 // pred_region
      %s926 = ssub.s32 256, 64
      %927 = vsyncadd [#allocation4], %s926
      %s928 = sshll.u32 [#allocation7], 4
      %s929 = int_to_ptr.vmem [resolvable:$true] %s928
      %934 = dma.vmem_to_hbm [thread:$0]  %s929, 64, %s7, [#allocation4], 64, 64, 4
    $region41: #{tpu_custom_call.1} parent=1 // pred_fallthru
      _
    // Predicated region
    $region42: #{tpu_custom_call.1} parent=1 // pred_check
      _
    $region43: #{tpu_custom_call.1} parent=1 // pred_check_branch
      %936 = sbr.rel (0) target = $region45
    $region44: #{tpu_custom_call.1} parent=1 // pred_region
      %937 = dma.done [#allocation4], 256
    $region45: #{tpu_custom_call.1} parent=1 // pred_fallthru
      _
    %938 = vsyncpa [#allocation3], 1
    %939 = vsyncpa [#allocation6], 1
    %940 = vsyncpa [#allocation4], 1

</llo_original>
